<compile_context>
chip_gen: v7x
topology: tpu7x:2x2x1
jax: 0.10.0
libtpu: 0.0.40
codegen_flags: <defaults>
</compile_context>

<pallas_src>
import math

import jax
import jax.numpy as jnp
from jax.experimental import pallas as pl
from jax.experimental.pallas import tpu as pltpu


def make_positional_encoding(d_model: int, max_len: int = 5000,
                             dtype=jnp.float32) -> jnp.ndarray:
    """Deterministic PE buffer, identical to the PyTorch __init__ (then cast)."""
    position = jnp.arange(max_len, dtype=jnp.float32)[:, None]          # (max_len, 1)
    div_term = jnp.exp(
        jnp.arange(0, d_model, 2, dtype=jnp.float32)
        * (-math.log(10000.0) / d_model)
    )                                                                    # (d_model//2,)
    pe = jnp.zeros((max_len, d_model), dtype=jnp.float32)
    pe = pe.at[:, 0::2].set(jnp.sin(position * div_term))
    pe = pe.at[:, 1::2].set(jnp.cos(position * div_term))
    return pe.astype(dtype)


def _pos_enc_kernel(x_ref, pe_ref, o_ref):
    # x_ref / o_ref : (bblk, tr, d)   a block of batch elements x row tile
    # pe_ref        : (tr, d)         shared PE tile, broadcast over the batch block
    o_ref[...] = x_ref[...] + pe_ref[...]


def _tile_and_vmem_defaults():
    """Pick (tile_target_bytes, vmem_limit_bytes) per TPU generation."""
    try:
        info = pltpu.get_tpu_info()
        vmem = getattr(info, "vmem_capacity_bytes", None)
        if vmem is not None and vmem >= 96 * 1024 * 1024:
            # v5e / v6e: 128 MiB VMEM -> bigger tiles amortize per-step overhead.
            return 8 * 1024 * 1024, 64 * 1024 * 1024
    except Exception:
        pass
    # v7x (64 MiB VMEM / TC) or unknown: conservative.
    return 4 * 1024 * 1024, 32 * 1024 * 1024


def positional_encoding_fwd(
    x: jnp.ndarray,
    pe: jnp.ndarray,
    *,
    tile_target_bytes: int | None = None,
    vmem_limit_bytes: int | None = None,
) -> jnp.ndarray:
    """x: (batch, seq, d_model) or (seq, d_model); pe: (max_len, d_model)."""
    if tile_target_bytes is None or vmem_limit_bytes is None:
        t_def, v_def = _tile_and_vmem_defaults()
        tile_target_bytes = t_def if tile_target_bytes is None else tile_target_bytes
        vmem_limit_bytes = v_def if vmem_limit_bytes is None else vmem_limit_bytes

    squeeze = x.ndim == 2
    if squeeze:
        x = x[None, ...]
    batch, seq, d = x.shape

    if pe.shape[0] < seq:
        raise ValueError(
            f"PositionalEncoding: seq_len={seq} exceeds PE max_len={pe.shape[0]}")
    if pe.shape[1] != d:
        raise ValueError(
            f"PositionalEncoding: d_model mismatch (x has {d}, pe has {pe.shape[1]})")

    # dtype-matched PE: a no-op if make_positional_encoding was built with x.dtype.
    pe_slice = pe[:seq]
    if pe_slice.dtype != x.dtype:
        pe_slice = pe_slice.astype(x.dtype)

    itemsize = x.dtype.itemsize
    sub = max(8, 32 // itemsize)          # sublane multiple: 8 f32, 16 bf16, 32 int8

    payload = seq * d * itemsize          # per-batch-element bytes
    if payload >= tile_target_bytes:
        # One batch element per block; tile the seq axis (sublane-multiple heights).
        bblk = 1
        tr = tile_target_bytes // (d * itemsize)
        if tr >= seq:
            tr = seq
        else:
            tr = max(sub, (tr // sub) * sub)
    else:
        # Small per-batch payload: group batch elements per block to amortize
        # the fixed per-grid-step pipeline overhead.  PE reuse preserved in-block.
        tr = seq
        bblk_target = max(1, min(batch, tile_target_bytes // max(payload, 1)))
        bblk = 1
        for cand in range(bblk_target, 0, -1):     # largest divisor of batch <= target
            if batch % cand == 0:
                bblk = cand
                break

    num_t = pl.cdiv(seq, tr)
    num_b = batch // bblk
    # batch is the innermost (fastest) axis so the PE block index is unchanged
    # between consecutive steps -> PE tile is not re-fetched per batch block.
    grid = (num_t, num_b)

    out = pl.pallas_call(
        _pos_enc_kernel,
        out_shape=jax.ShapeDtypeStruct((batch, seq, d), x.dtype),
        grid_spec=pltpu.PrefetchScalarGridSpec(
            num_scalar_prefetch=0,
            grid=grid,
            in_specs=[
                pl.BlockSpec((bblk, tr, d), lambda t, b: (b, t, 0)),
                pl.BlockSpec((tr, d), lambda t, b: (t, 0)),
            ],
            out_specs=pl.BlockSpec((bblk, tr, d), lambda t, b: (b, t, 0)),
        ),
        compiler_params=pltpu.CompilerParams(
            dimension_semantics=("parallel", "parallel"),
            vmem_limit_bytes=vmem_limit_bytes,
        ),
        cost_estimate=pl.CostEstimate(
            flops=batch * seq * d,
            transcendentals=0,
            bytes_accessed=2 * batch * seq * d * itemsize + seq * d * itemsize,
        ),
    )(x, pe_slice)

    if squeeze:
        out = out[0]
    return out


if __name__ == "__main__":
    # --- main test: batch-first 3-D input (small shapes, batch-grouped path) ---
    d_model, max_len = 32, 64
    batch, seq = 2, 8
    pe = make_positional_encoding(d_model, max_len)

    x = jax.random.normal(jax.random.PRNGKey(0), (batch, seq, d_model), dtype=jnp.float32)
    out = jax.block_until_ready(positional_encoding_fwd(x, pe))
    ref = x + pe[:seq][None, :, :]
    assert out.shape == x.shape
    assert jnp.allclose(out, ref, atol=1e-6), "3-D mismatch vs reference"

    # --- 2-D input branch (x.dim() == 2) ---
    x2 = jax.random.normal(jax.random.PRNGKey(1), (seq, d_model), dtype=jnp.float32)
    out2 = jax.block_until_ready(positional_encoding_fwd(x2, pe))
    assert jnp.allclose(out2, x2 + pe[:seq], atol=1e-6), "2-D mismatch vs reference"

    # --- multi-row-tile path with a ragged last tile (small tile budget) ---
    d3, seq3, batch3 = 64, 640, 2
    pe3 = make_positional_encoding(d3, seq3)
    x3 = jax.random.normal(jax.random.PRNGKey(2), (batch3, seq3, d3), dtype=jnp.float32)
    out3 = jax.block_until_ready(
        positional_encoding_fwd(x3, pe3, tile_target_bytes=64 * 1024)
    )
    assert jnp.allclose(out3, x3 + pe3[:seq3][None, :, :], atol=1e-6), "tiled mismatch"

    # --- lane-unfriendly d_model (not a multiple of 128): natural layout, no reshape ---
    d4, seq4 = 24, 8
    pe4 = make_positional_encoding(d4, 32)
    x4 = jax.random.normal(jax.random.PRNGKey(3), (batch, seq4, d4), dtype=jnp.float32)
    out4 = jax.block_until_ready(positional_encoding_fwd(x4, pe4))
    assert jnp.allclose(out4, x4 + pe4[:seq4][None, :, :], atol=1e-6), "fallback mismatch"

    # --- bf16 activations: PE built in bf16, same-dtype add in-kernel ---
    pe5 = make_positional_encoding(d_model, max_len, dtype=jnp.bfloat16)
    x5 = jax.random.normal(jax.random.PRNGKey(4), (batch, seq, d_model), dtype=jnp.bfloat16)
    out5 = jax.block_until_ready(positional_encoding_fwd(x5, pe5))
    ref5 = x5 + pe5[:seq][None, :, :]
    assert jnp.allclose(out5.astype(jnp.float32), ref5.astype(jnp.float32), atol=1e-2), \
        "bf16 mismatch vs reference"

    print("KERNEL_OK")
</pallas_src>

<mosaic_0001>
module attributes {stable_mosaic.version = 11 : i64} {
  func.func @_pos_enc_kernel(%arg0: i32, %arg1: i32, %arg2: memref<2x8x32xf32, #tpu.memory_space<vmem>>, %arg3: memref<8x32xf32, #tpu.memory_space<vmem>>, %arg4: memref<2x8x32xf32, #tpu.memory_space<vmem>>) attributes {dimension_semantics = [#tpu.dimension_semantics<parallel>, #tpu.dimension_semantics<parallel>], iteration_bounds = array<i64: 1, 1>, scalar_prefetch = 0 : i64, scratch_operands = 0 : i64, tpu.core_type = #tpu.core_type<tc>, window_params = [{transform_indices = @transform_0, window_bounds = array<i64: 2, 8, 32>}, {transform_indices = @transform_1, window_bounds = array<i64: 8, 32>}, {transform_indices = @transform_2, window_bounds = array<i64: 2, 8, 32>}]} {
    %c0 = arith.constant 0 : index
    %c0_0 = arith.constant 0 : index
    %c0_1 = arith.constant 0 : index
    %0 = vector.load %arg2[%c0, %c0_0, %c0_1] : memref<2x8x32xf32, #tpu.memory_space<vmem>>, vector<2x8x32xf32>
    %c0_2 = arith.constant 0 : index
    %c0_3 = arith.constant 0 : index
    %1 = vector.load %arg3[%c0_2, %c0_3] : memref<8x32xf32, #tpu.memory_space<vmem>>, vector<8x32xf32>
    %2 = vector.shape_cast %1 : vector<8x32xf32> to vector<1x8x32xf32>
    %3 = vector.broadcast %2 : vector<1x8x32xf32> to vector<2x8x32xf32>
    %4 = arith.addf %0, %3 : vector<2x8x32xf32>
    %c0_4 = arith.constant 0 : index
    %c0_5 = arith.constant 0 : index
    %c0_6 = arith.constant 0 : index
    %5 = vector.load %arg4[%c0_4, %c0_5, %c0_6] : memref<2x8x32xf32, #tpu.memory_space<vmem>>, vector<2x8x32xf32>
    tpu.vector_store %arg4[%c0_4, %c0_5, %c0_6], %4 {strides = array<i32>} : memref<2x8x32xf32, #tpu.memory_space<vmem>>, vector<2x8x32xf32>,
    return
  }
  func.func @transform_0(%arg0: i32, %arg1: i32) -> (i32, i32, i32) {
    %c0_i32 = arith.constant 0 : i32
    %c0_i32_0 = arith.constant 0 : i32
    return %arg1, %arg0, %c0_i32 : i32, i32, i32
  }
  func.func @transform_1(%arg0: i32, %arg1: i32) -> (i32, i32) {
    %c0_i32 = arith.constant 0 : i32
    %c0_i32_0 = arith.constant 0 : i32
    return %arg0, %c0_i32 : i32, i32
  }
  func.func @transform_2(%arg0: i32, %arg1: i32) -> (i32, i32, i32) {
    %c0_i32 = arith.constant 0 : i32
    %c0_i32_0 = arith.constant 0 : i32
    return %arg1, %arg0, %c0_i32 : i32, i32, i32
  }
}

</mosaic_0001>

<llo_original>
// kernel: tpu_custom_call.1
$region0: #{tpu_custom_call.1}
  #allocation0 [shape = 'u32[]', space=smem, size = 0x4, offset = 0x4, fixed_abs, tag = 'smem constant byte address 0x4 - core index']
  #allocation1 [shape = 'u32[144,128]{1,0:T(1,128)}', space=vmem, size = 0x12000, scoped, tag = 'internal scratch']
  %s0 = inlined_call_operand.hbm [shape: f32[2,8,32], index: 0, kind: input, shape index: {}]
  %s1 = inlined_call_operand.hbm [shape: f32[8,32], index: 1, kind: input, shape index: {}]
  %s2 = inlined_call_operand.hbm [shape: f32[2,8,32], index: 2, kind: output, shape index: {}]
  %s3 = sld [smem:[#allocation0]]
  $region26: #{tpu_custom_call.1} parent=0
    _
  %s5 = ssub.s32 1, %s3
  %s6 = scalar_select 0, %s5, %s3
  $region1: #{tpu_custom_call.1} parent=0
    #allocation2 [shape = 'u8[8192]{0}', space=vmem, size = 0x2000, scoped, tag = 'input window, operand 0, single buffered']
    #allocation3 [shape = 's32[1]{0}', space=sflag, size = 0x4, scoped, tag = 'scoped memory for tpu_custom_call.1']
    #allocation4 [shape = 's32[1]{0}', space=sflag, size = 0x4, scoped, tag = 'scoped memory for tpu_custom_call.1']
    #allocation5 [shape = 'u8[4096]{0}', space=vmem, size = 0x1000, scoped, tag = 'input window, operand 1, single buffered']
    #allocation6 [shape = 's32[1]{0}', space=sflag, size = 0x4, scoped, tag = 'scoped memory for tpu_custom_call.1']
    #allocation7 [shape = 'u8[8192]{0}', space=vmem, size = 0x2000, scoped, tag = 'output window, operand 0, single buffered']
    %7 = vsyncpa [#allocation3], 0
    %8 = vsyncpa [#allocation6], 0
    %9 = vsyncpa [#allocation4], 0
    // Predicated region
    $region2: #{tpu_custom_call.1} parent=1 // pred_check
      _
    $region3: #{tpu_custom_call.1} parent=1 // pred_check_branch
      %11 = sbr.rel (0) target = $region5
    $region4: #{tpu_custom_call.1} parent=1 // pred_region
      %s13 = ssub.s32 256, 256
      %14 = vsyncadd [#allocation3], %s13
      %s15 = sshll.u32 [#allocation2], 4
      %s16 = int_to_ptr.vmem [resolvable:$true] %s15
      %21 = dma.hbm_to_vmem [thread:$0]  %s0, 256, %s16, [#allocation3], 128, 128, 8
    $region5: #{tpu_custom_call.1} parent=1 // pred_fallthru
      _
    // Predicated region
    $region6: #{tpu_custom_call.1} parent=1 // pred_check
      _
    $region7: #{tpu_custom_call.1} parent=1 // pred_check_branch
      %23 = sbr.rel (0) target = $region9
    $region8: #{tpu_custom_call.1} parent=1 // pred_region
      %s25 = ssub.s32 128, 128
      %26 = vsyncadd [#allocation6], %s25
      %s28 = sshll.u32 [#allocation5], 4
      %s29 = int_to_ptr.vmem [resolvable:$true] %s28
      %31 = dma.hbm_to_vmem [thread:$0]  %s1, 128, %s29, [#allocation6]
    $region9: #{tpu_custom_call.1} parent=1 // pred_fallthru
      _
    // Predicated region
    $region10: #{tpu_custom_call.1} parent=1 // pred_check
      _
    $region11: #{tpu_custom_call.1} parent=1 // pred_check_branch
      %33 = sbr.rel (0) target = $region13
    $region12: #{tpu_custom_call.1} parent=1 // pred_region
      %34 = dma.done [#allocation3], 256
    $region13: #{tpu_custom_call.1} parent=1 // pred_fallthru
      _
    // Predicated region
    $region14: #{tpu_custom_call.1} parent=1 // pred_check
      _
    $region15: #{tpu_custom_call.1} parent=1 // pred_check_branch
      %36 = sbr.rel (0) target = $region17
    $region16: #{tpu_custom_call.1} parent=1 // pred_region
      %37 = dma.done [#allocation6], 128
    $region17: #{tpu_custom_call.1} parent=1 // pred_fallthru
      _
    %v38 = vld [vmem:[#allocation2] sm:$0xff]
    %v39 = vld [vmem:[#allocation2 + $0x8] sm:$0xff]
    %v40 = vld [vmem:[#allocation5] sm:$0xff]
    %v41 = vadd.f32 %v38, %v40
    %v42 = vadd.f32 %v39, %v40
    %vm43 = vcmask 261120
    %44 = vst.msk [vmem:[#allocation7] sm:$0xff] %vm43, %v41
    %45 = vst.msk [vmem:[#allocation7 + $0x8] sm:$0xff] %vm43, %v42
    // Predicated region
    $region18: #{tpu_custom_call.1} parent=1 // pred_check
      _
    $region19: #{tpu_custom_call.1} parent=1 // pred_check_branch
      %47 = sbr.rel (0) target = $region21
    $region20: #{tpu_custom_call.1} parent=1 // pred_region
      %s49 = ssub.s32 256, 256
      %50 = vsyncadd [#allocation4], %s49
      %s51 = sshll.u32 [#allocation7], 4
      %s52 = int_to_ptr.vmem [resolvable:$true] %s51
      %57 = dma.vmem_to_hbm [thread:$0]  %s52, 256, %s2, [#allocation4], 128, 128, 8
    $region21: #{tpu_custom_call.1} parent=1 // pred_fallthru
      _
    // Predicated region
    $region22: #{tpu_custom_call.1} parent=1 // pred_check
      _
    $region23: #{tpu_custom_call.1} parent=1 // pred_check_branch
      %59 = sbr.rel (0) target = $region25
    $region24: #{tpu_custom_call.1} parent=1 // pred_region
      %60 = dma.done [#allocation4], 256
    $region25: #{tpu_custom_call.1} parent=1 // pred_fallthru
      _
    %61 = vsyncpa [#allocation3], 1
    %62 = vsyncpa [#allocation6], 1
    %63 = vsyncpa [#allocation4], 1

</llo_original>
